<compile_context>
chip_gen: v7x
topology: tpu7x:2x2x1
jax: 0.10.0
libtpu: 0.0.40
codegen_flags: <defaults>
</compile_context>

<pallas_src>
import numpy as np
import jax
import jax.numpy as jnp
from jax.experimental import pallas as pl
from jax.experimental.pallas import tpu as pltpu


def _i32(v):
    """Reinterpret a python int as its int32 two's-complement value."""
    v &= 0xFFFFFFFF
    return int(v - (1 << 32) if v >= (1 << 31) else v)


# primes from the torch `hash()` (only the first 3 are used for 3-D coords); prime0 == 1.
P1 = _i32(2654435761)
P2 = _i32(805459861)

# corner offsets, torch BOX_OFFSETS order: [[i, j, k] for i in (0,1) for j in (0,1) for k in (0,1)]
OFFSETS = np.array([[i, j, k] for i in (0, 1) for j in (0, 1) for k in (0, 1)],
                   dtype=np.int32)                      # (8, 3)


class HashEmbedderPallas:
    """Multi-resolution hash-grid positional encoding (forward of torch HashEmbedder)."""

    def __init__(self, bounding_box, n_levels=16, n_features_per_level=2,
                 log2_hashmap_size=19, base_resolution=16, finest_resolution=512,
                 tile_n=4096, key=None):
        self.box_min = np.asarray(bounding_box[0], np.float32).reshape(3)
        self.box_max = np.asarray(bounding_box[1], np.float32).reshape(3)
        self.L = int(n_levels)
        self.F = int(n_features_per_level)
        self.log2T = int(log2_hashmap_size)
        self.T = 1 << self.log2T
        assert tile_n % 128 == 0
        self.tile_n = int(tile_n)

        # b = exp((log(finest) - log(base)) / (L - 1)); resolution_l = floor(base * b^l)
        b = np.exp((np.log(np.float32(finest_resolution)) -
                    np.log(np.float32(base_resolution))) /
                   np.float32(n_levels - 1)).astype(np.float32)
        self.resolutions = np.floor(
            np.float32(base_resolution) * b ** np.arange(n_levels, dtype=np.float32)
        ).astype(np.float32)                                          # (L,)

        # per-(axis, level) voxel size and its reciprocal; rows = axis*L + level.
        # Only the reciprocal enters the kernels (the gsz input was eliminated).
        gsz = ((self.box_max[:, None] - self.box_min[:, None]) /
               self.resolutions[None, :]).astype(np.float32)          # (3, L)
        inv = (np.float32(1.0) / gsz).astype(np.float32)
        self.gsz_np, self.inv_np = gsz, inv                           # kept for the reference
        self.inv_col = jnp.asarray(inv.reshape(3 * self.L, 1))        # (3L, 1) f32
        self.lofs_col = jnp.asarray(
            (np.arange(self.L, dtype=np.int64) * self.T).astype(np.int32).reshape(self.L, 1))

        # nn.Embedding weights, uniform(-1e-4, 1e-4), deterministic init
        if key is None:
            key = jax.random.PRNGKey(0)
        self.tables = jax.random.uniform(
            key, (self.L, self.T, self.F), jnp.float32, minval=-1e-4, maxval=1e-4)
        # (F, L*T) layout: one fused XLA gather for all levels, hashed read once,
        # and the gather output lands directly in the kernel-B-friendly (F, 8L, N)
        # layout (N minor) without any extra re-layout pass.
        self.table_ft = jnp.transpose(self.tables, (2, 0, 1)).reshape(self.F, self.L * self.T)

    # ---- kernel A: voxel-corner hash indices (all L levels per tile) ----
    def _hash_kernel(self, x_ref, inv_ref, lofs_ref, h_ref):
        L = self.L
        mask = (1 << self.log2T) - 1
        lofs = lofs_ref[...]                                  # (L, 1) i32, = l * T

        bl = []
        for a in range(3):                                    # per coordinate axis
            bmin = float(self.box_min[a])
            bmax = float(self.box_max[a])
            xa = x_ref[a:a + 1, :]                            # (1, TN)
            inv = inv_ref[a * L:(a + 1) * L, :]               # (L, 1)
            xc = jnp.minimum(jnp.maximum(xa, bmin), bmax)     # clamp to bbox
            bl.append(jnp.floor((xc - bmin) * inv).astype(jnp.int32))   # (L, TN)

        # hash: prime for axis 0 is 1 (no multiply); +1 corners are adds, not extra
        # int32 multiplies; mask applied once per axis term (AND distributes over XOR,
        # low-bit mask commutes with the +prime add mod 2^k), so no per-corner AND.
        hx = (bl[0] & mask, (bl[0] + 1) & mask)
        hy_raw = bl[1] * P1                                   # int32 wraparound == uint32 hash
        hy = (hy_raw & mask, (hy_raw + P1) & mask)
        hz_raw = bl[2] * P2
        hz = (hz_raw & mask, (hz_raw + P2) & mask)
        c = 0
        for i in range(2):                                    # BOX_OFFSETS order (i, j, k)
            for j in range(2):
                for k in range(2):
                    h_ref[c * L:(c + 1) * L, :] = (hx[i] ^ hy[j] ^ hz[k]) + lofs
                    c += 1

    # ---- kernel B: trilinear interpolation (weights recomputed in-kernel) ----
    def _interp_kernel(self, x_ref, inv_ref, e_ref, o_ref):
        L, F = self.L, self.F

        w = []
        for a in range(3):
            bmin = float(self.box_min[a])
            bmax = float(self.box_max[a])
            xa = x_ref[a:a + 1, :]                            # (1, TN)
            inv = inv_ref[a * L:(a + 1) * L, :]               # (L, 1)
            xc = jnp.minimum(jnp.maximum(xa, bmin), bmax)
            bl = jnp.floor((xc - bmin) * inv)                 # (L, TN) f32, same floor as kernel A
            # NOTE: weights use the ORIGINAL (un-clipped) x, matching the torch forward.
            w.append((xa - bmin) * inv - bl)                  # (L, TN)
        w0, w1, w2 = w

        for f in range(F):
            base = f * 8 * L

            def corner(k, base=base):
                return e_ref[base + k * L: base + (k + 1) * L, :]     # (L, TN)

            e0, e1, e2, e3 = corner(0), corner(1), corner(2), corner(3)
            e4, e5, e6, e7 = corner(4), corner(5), corner(6), corner(7)
            c00 = e0 + w0 * (e4 - e0)                         # lerp form: a + w*(b-a)
            c01 = e1 + w0 * (e5 - e1)
            c10 = e2 + w0 * (e6 - e2)
            c11 = e3 + w0 * (e7 - e3)
            c0 = c00 + w1 * (c10 - c00)
            c1 = c01 + w1 * (c11 - c01)
            o_ref[f * L:(f + 1) * L, :] = c0 + w2 * (c1 - c0)

    # ---- forward ----
    def __call__(self, x):
        B, S, _ = x.shape
        N = B * S
        L, F = self.L, self.F

        n128 = ((N + 127) // 128) * 128
        TN = min(self.tile_n, n128)                 # lane tile (multiple of 128)
        if n128 >= 256 and n128 < 2 * TN:
            # ensure at least two N-tiles so both v7x TensorCores get work
            TN = ((n128 // 2 + 127) // 128) * 128
        Npad = ((N + TN - 1) // TN) * TN
        nt = Npad // TN

        x_flat = x.reshape(N, 3).astype(jnp.float32)
        x_t = jnp.zeros((3, Npad), jnp.float32).at[:, :N].set(x_flat.T)

        hashed = pl.pallas_call(
            self._hash_kernel,
            out_shape=jax.ShapeDtypeStruct((8 * L, Npad), jnp.int32),
            grid=(nt,),
            in_specs=[pl.BlockSpec((3, TN), lambda n: (0, n)),
                      pl.BlockSpec((3 * L, 1), lambda n: (0, 0)),
                      pl.BlockSpec((L, 1), lambda n: (0, 0))],
            out_specs=pl.BlockSpec((8 * L, TN), lambda n: (0, n)),
            compiler_params=pltpu.CompilerParams(
                dimension_semantics=("parallel",)),
        )(x_t, self.inv_col, self.lofs_col)

        # nn.Embedding lookup: one fused random row-gather over all levels.
        # Padded lanes hash to valid (< L*T) rows (bl comes from clamped x), so no OOB.
        # TODO(synk): no supported in-kernel large-table vector gather on Mosaic TPU.
        embeds = jnp.take(self.table_ft, hashed, axis=1)      # (F, 8*L, Npad)
        embeds = embeds.reshape(F * 8 * L, Npad)              # row = f*8L + corner*L + level

        out = pl.pallas_call(
            self._interp_kernel,
            out_shape=jax.ShapeDtypeStruct((F * L, Npad), jnp.float32),
            grid=(nt,),
            in_specs=[pl.BlockSpec((3, TN), lambda n: (0, n)),
                      pl.BlockSpec((3 * L, 1), lambda n: (0, 0)),
                      pl.BlockSpec((F * 8 * L, TN), lambda n: (0, n))],
            out_specs=pl.BlockSpec((F * L, TN), lambda n: (0, n)),
            compiler_params=pltpu.CompilerParams(
                dimension_semantics=("parallel",)),
        )(x_t, self.inv_col, embeds)

        # (F, L, Npad) -> (N, L, F) -> (B, S, L*F): level-major, feature-minor,
        # matching torch.cat(x_embedded_all, dim=-1).
        out = jnp.transpose(out.reshape(F, L, Npad), (2, 1, 0))
        return out.reshape(Npad, L * F)[:N].reshape(B, S, L * F)


# ----------------------------- pure-JAX reference ----------------------------
def hash_embed_reference(x, tables, box_min, box_max, gsz, inv_gsz, log2T):
    """Pure-JAX reference (same math as the torch forward)."""
    B, S, _ = x.shape
    L, T, F = tables.shape
    xf = x.reshape(-1, 3).astype(jnp.float32)
    bmin = jnp.asarray(box_min, jnp.float32).reshape(1, 3)
    bmax = jnp.asarray(box_max, jnp.float32).reshape(1, 3)
    mask = (1 << log2T) - 1
    offs = jnp.asarray(OFFSETS)                               # (8, 3)
    primes = jnp.asarray(np.array([1, P1, P2], np.int32))
    outs = []
    for l in range(L):
        g = jnp.asarray(gsz[:, l]).reshape(1, 3)
        iv = jnp.asarray(inv_gsz[:, l]).reshape(1, 3)
        xc = jnp.clip(xf, bmin, bmax)
        bl = jnp.floor((xc - bmin) * iv).astype(jnp.int32)
        vmin = bl.astype(jnp.float32) * g + bmin
        w = (xf - vmin) * iv                                  # uses UN-clipped x (torch semantics)
        corners = bl[:, None, :] + offs[None]                 # (N, 8, 3)
        h = ((corners[..., 0] * primes[0]) ^
             (corners[..., 1] * primes[1]) ^
             (corners[..., 2] * primes[2])) & mask
        e = tables[l][h]                                      # (N, 8, F)
        w0, w1, w2 = w[:, 0:1], w[:, 1:2], w[:, 2:3]
        c00 = e[:, 0] * (1 - w0) + e[:, 4] * w0
        c01 = e[:, 1] * (1 - w0) + e[:, 5] * w0
        c10 = e[:, 2] * (1 - w0) + e[:, 6] * w0
        c11 = e[:, 3] * (1 - w0) + e[:, 7] * w0
        c0 = c00 * (1 - w1) + c10 * w1
        c1 = c01 * (1 - w1) + c11 * w1
        outs.append(c0 * (1 - w2) + c1 * w2)
    return jnp.concatenate(outs, axis=-1).reshape(B, S, L * F)


# ----------------------------- main ------------------------------------------
if __name__ == "__main__":
    key = jax.random.PRNGKey(0)
    k_tab, k_x = jax.random.split(key)

    box_min = np.array([-1.0, -1.0, -1.0], np.float32)
    box_max = np.array([1.0, 1.0, 1.0], np.float32)

    embedder = HashEmbedderPallas(
        (box_min, box_max),
        n_levels=16, n_features_per_level=2,
        log2_hashmap_size=14,          # scaled-down hash table for the demo
        base_resolution=16, finest_resolution=512,
        key=k_tab)

    B, S = 2, 64                        # 128 sample points in 3-D
    x = jax.random.uniform(k_x, (B, S, 3), jnp.float32, minval=-1.0, maxval=1.0)

    out = jax.block_until_ready(embedder(x))
    assert out.shape == (B, S, embedder.L * embedder.F), out.shape

    ref = jax.block_until_ready(hash_embed_reference(
        x, embedder.tables, box_min, box_max,
        embedder.gsz_np, embedder.inv_np, embedder.log2T))
    np.testing.assert_allclose(np.asarray(out), np.asarray(ref),
                               rtol=1e-5, atol=1e-6)

    print("KERNEL_OK")
</pallas_src>

<mosaic_0001>
module attributes {stable_mosaic.version = 11 : i64} {
  func.func @_hash_kernel(%arg0: i32, %arg1: memref<3x128xf32, #tpu.memory_space<vmem>>, %arg2: memref<48x1xf32, #tpu.memory_space<vmem>>, %arg3: memref<16x1xi32, #tpu.memory_space<vmem>>, %arg4: memref<128x128xi32, #tpu.memory_space<vmem>>) attributes {dimension_semantics = [#tpu.dimension_semantics<parallel>], iteration_bounds = array<i64: 1>, scalar_prefetch = 0 : i64, scratch_operands = 0 : i64, tpu.core_type = #tpu.core_type<tc>, window_params = [{transform_indices = @transform_0, window_bounds = array<i64: 3, 128>}, {pipeline_mode = #tpu.pipeline_mode<synchronous>, transform_indices = @transform_1, window_bounds = array<i64: 48, 1>}, {pipeline_mode = #tpu.pipeline_mode<synchronous>, transform_indices = @transform_2, window_bounds = array<i64: 16, 1>}, {transform_indices = @transform_3, window_bounds = array<i64: 128, 128>}]} {
    %c0 = arith.constant 0 : index
    %c0_0 = arith.constant 0 : index
    %0 = vector.load %arg3[%c0, %c0_0] : memref<16x1xi32, #tpu.memory_space<vmem>>, vector<16x1xi32>
    %c0_1 = arith.constant 0 : index
    %c0_2 = arith.constant 0 : index
    %1 = vector.load %arg1[%c0_1, %c0_2] : memref<3x128xf32, #tpu.memory_space<vmem>>, vector<1x128xf32>
    %c0_3 = arith.constant 0 : index
    %c0_4 = arith.constant 0 : index
    %2 = vector.load %arg2[%c0_3, %c0_4] : memref<48x1xf32, #tpu.memory_space<vmem>>, vector<16x1xf32>
    %cst = arith.constant -1.000000e+00 : f32
    %3 = vector.broadcast %cst : f32 to vector<1x128xf32>
    %4 = arith.maximumf %1, %3 : vector<1x128xf32>
    %cst_5 = arith.constant 1.000000e+00 : f32
    %5 = vector.broadcast %cst_5 : f32 to vector<1x128xf32>
    %6 = arith.minimumf %4, %5 : vector<1x128xf32>
    %cst_6 = arith.constant -1.000000e+00 : f32
    %7 = vector.broadcast %cst_6 : f32 to vector<1x128xf32>
    %8 = arith.subf %6, %7 : vector<1x128xf32>
    %9 = vector.broadcast %8 : vector<1x128xf32> to vector<16x128xf32>
    %10 = vector.broadcast %2 : vector<16x1xf32> to vector<16x128xf32>
    %11 = arith.mulf %9, %10 : vector<16x128xf32>
    %12 = math.floor %11 : vector<16x128xf32>
    %13 = arith.fptosi %12 : vector<16x128xf32> to vector<16x128xi32>
    %c1 = arith.constant 1 : index
    %c0_7 = arith.constant 0 : index
    %14 = vector.load %arg1[%c1, %c0_7] : memref<3x128xf32, #tpu.memory_space<vmem>>, vector<1x128xf32>
    %c16 = arith.constant 16 : index
    %c0_8 = arith.constant 0 : index
    %15 = vector.load %arg2[%c16, %c0_8] : memref<48x1xf32, #tpu.memory_space<vmem>>, vector<16x1xf32>
    %cst_9 = arith.constant -1.000000e+00 : f32
    %16 = vector.broadcast %cst_9 : f32 to vector<1x128xf32>
    %17 = arith.maximumf %14, %16 : vector<1x128xf32>
    %cst_10 = arith.constant 1.000000e+00 : f32
    %18 = vector.broadcast %cst_10 : f32 to vector<1x128xf32>
    %19 = arith.minimumf %17, %18 : vector<1x128xf32>
    %cst_11 = arith.constant -1.000000e+00 : f32
    %20 = vector.broadcast %cst_11 : f32 to vector<1x128xf32>
    %21 = arith.subf %19, %20 : vector<1x128xf32>
    %22 = vector.broadcast %21 : vector<1x128xf32> to vector<16x128xf32>
    %23 = vector.broadcast %15 : vector<16x1xf32> to vector<16x128xf32>
    %24 = arith.mulf %22, %23 : vector<16x128xf32>
    %25 = math.floor %24 : vector<16x128xf32>
    %26 = arith.fptosi %25 : vector<16x128xf32> to vector<16x128xi32>
    %c2 = arith.constant 2 : index
    %c0_12 = arith.constant 0 : index
    %27 = vector.load %arg1[%c2, %c0_12] : memref<3x128xf32, #tpu.memory_space<vmem>>, vector<1x128xf32>
    %c32 = arith.constant 32 : index
    %c0_13 = arith.constant 0 : index
    %28 = vector.load %arg2[%c32, %c0_13] : memref<48x1xf32, #tpu.memory_space<vmem>>, vector<16x1xf32>
    %cst_14 = arith.constant -1.000000e+00 : f32
    %29 = vector.broadcast %cst_14 : f32 to vector<1x128xf32>
    %30 = arith.maximumf %27, %29 : vector<1x128xf32>
    %cst_15 = arith.constant 1.000000e+00 : f32
    %31 = vector.broadcast %cst_15 : f32 to vector<1x128xf32>
    %32 = arith.minimumf %30, %31 : vector<1x128xf32>
    %cst_16 = arith.constant -1.000000e+00 : f32
    %33 = vector.broadcast %cst_16 : f32 to vector<1x128xf32>
    %34 = arith.subf %32, %33 : vector<1x128xf32>
    %35 = vector.broadcast %34 : vector<1x128xf32> to vector<16x128xf32>
    %36 = vector.broadcast %28 : vector<16x1xf32> to vector<16x128xf32>
    %37 = arith.mulf %35, %36 : vector<16x128xf32>
    %38 = math.floor %37 : vector<16x128xf32>
    %39 = arith.fptosi %38 : vector<16x128xf32> to vector<16x128xi32>
    %c16383_i32 = arith.constant 16383 : i32
    %40 = vector.broadcast %c16383_i32 : i32 to vector<16x128xi32>
    %41 = arith.andi %13, %40 : vector<16x128xi32>
    %c1_i32 = arith.constant 1 : i32
    %42 = vector.broadcast %c1_i32 : i32 to vector<16x128xi32>
    %43 = arith.addi %13, %42 : vector<16x128xi32>
    %c16383_i32_17 = arith.constant 16383 : i32
    %44 = vector.broadcast %c16383_i32_17 : i32 to vector<16x128xi32>
    %45 = arith.andi %43, %44 : vector<16x128xi32>
    %c-1640531535_i32 = arith.constant -1640531535 : i32
    %46 = vector.broadcast %c-1640531535_i32 : i32 to vector<16x128xi32>
    %47 = arith.muli %26, %46 : vector<16x128xi32>
    %c16383_i32_18 = arith.constant 16383 : i32
    %48 = vector.broadcast %c16383_i32_18 : i32 to vector<16x128xi32>
    %49 = arith.andi %47, %48 : vector<16x128xi32>
    %c-1640531535_i32_19 = arith.constant -1640531535 : i32
    %50 = vector.broadcast %c-1640531535_i32_19 : i32 to vector<16x128xi32>
    %51 = arith.addi %47, %50 : vector<16x128xi32>
    %c16383_i32_20 = arith.constant 16383 : i32
    %52 = vector.broadcast %c16383_i32_20 : i32 to vector<16x128xi32>
    %53 = arith.andi %51, %52 : vector<16x128xi32>
    %c805459861_i32 = arith.constant 805459861 : i32
    %54 = vector.broadcast %c805459861_i32 : i32 to vector<16x128xi32>
    %55 = arith.muli %39, %54 : vector<16x128xi32>
    %c16383_i32_21 = arith.constant 16383 : i32
    %56 = vector.broadcast %c16383_i32_21 : i32 to vector<16x128xi32>
    %57 = arith.andi %55, %56 : vector<16x128xi32>
    %c805459861_i32_22 = arith.constant 805459861 : i32
    %58 = vector.broadcast %c805459861_i32_22 : i32 to vector<16x128xi32>
    %59 = arith.addi %55, %58 : vector<16x128xi32>
    %c16383_i32_23 = arith.constant 16383 : i32
    %60 = vector.broadcast %c16383_i32_23 : i32 to vector<16x128xi32>
    %61 = arith.andi %59, %60 : vector<16x128xi32>
    %62 = arith.xori %41, %49 : vector<16x128xi32>
    %63 = arith.xori %62, %57 : vector<16x128xi32>
    %64 = vector.broadcast %0 : vector<16x1xi32> to vector<16x128xi32>
    %65 = arith.addi %63, %64 : vector<16x128xi32>
    %c0_24 = arith.constant 0 : index
    %c0_25 = arith.constant 0 : index
    %66 = vector.load %arg4[%c0_24, %c0_25] : memref<128x128xi32, #tpu.memory_space<vmem>>, vector<16x128xi32>
    tpu.vector_store %arg4[%c0_24, %c0_25], %65 {strides = array<i32>} : memref<128x128xi32, #tpu.memory_space<vmem>>, vector<16x128xi32>,
    %67 = arith.xori %41, %49 : vector<16x128xi32>
    %68 = arith.xori %67, %61 : vector<16x128xi32>
    %69 = vector.broadcast %0 : vector<16x1xi32> to vector<16x128xi32>
    %70 = arith.addi %68, %69 : vector<16x128xi32>
    %c16_26 = arith.constant 16 : index
    %c0_27 = arith.constant 0 : index
    %71 = vector.load %arg4[%c16_26, %c0_27] : memref<128x128xi32, #tpu.memory_space<vmem>>, vector<16x128xi32>
    tpu.vector_store %arg4[%c16_26, %c0_27], %70 {strides = array<i32>} : memref<128x128xi32, #tpu.memory_space<vmem>>, vector<16x128xi32>,
    %72 = arith.xori %41, %53 : vector<16x128xi32>
    %73 = arith.xori %72, %57 : vector<16x128xi32>
    %74 = vector.broadcast %0 : vector<16x1xi32> to vector<16x128xi32>
    %75 = arith.addi %73, %74 : vector<16x128xi32>
    %c32_28 = arith.constant 32 : index
    %c0_29 = arith.constant 0 : index
    %76 = vector.load %arg4[%c32_28, %c0_29] : memref<128x128xi32, #tpu.memory_space<vmem>>, vector<16x128xi32>
    tpu.vector_store %arg4[%c32_28, %c0_29], %75 {strides = array<i32>} : memref<128x128xi32, #tpu.memory_space<vmem>>, vector<16x128xi32>,
    %77 = arith.xori %41, %53 : vector<16x128xi32>
    %78 = arith.xori %77, %61 : vector<16x128xi32>
    %79 = vector.broadcast %0 : vector<16x1xi32> to vector<16x128xi32>
    %80 = arith.addi %78, %79 : vector<16x128xi32>
    %c48 = arith.constant 48 : index
    %c0_30 = arith.constant 0 : index
    %81 = vector.load %arg4[%c48, %c0_30] : memref<128x128xi32, #tpu.memory_space<vmem>>, vector<16x128xi32>
    tpu.vector_store %arg4[%c48, %c0_30], %80 {strides = array<i32>} : memref<128x128xi32, #tpu.memory_space<vmem>>, vector<16x128xi32>,
    %82 = arith.xori %45, %49 : vector<16x128xi32>
    %83 = arith.xori %82, %57 : vector<16x128xi32>
    %84 = vector.broadcast %0 : vector<16x1xi32> to vector<16x128xi32>
    %85 = arith.addi %83, %84 : vector<16x128xi32>
    %c64 = arith.constant 64 : index
    %c0_31 = arith.constant 0 : index
    %86 = vector.load %arg4[%c64, %c0_31] : memref<128x128xi32, #tpu.memory_space<vmem>>, vector<16x128xi32>
    tpu.vector_store %arg4[%c64, %c0_31], %85 {strides = array<i32>} : memref<128x128xi32, #tpu.memory_space<vmem>>, vector<16x128xi32>,
    %87 = arith.xori %45, %49 : vector<16x128xi32>
    %88 = arith.xori %87, %61 : vector<16x128xi32>
    %89 = vector.broadcast %0 : vector<16x1xi32> to vector<16x128xi32>
    %90 = arith.addi %88, %89 : vector<16x128xi32>
    %c80 = arith.constant 80 : index
    %c0_32 = arith.constant 0 : index
    %91 = vector.load %arg4[%c80, %c0_32] : memref<128x128xi32, #tpu.memory_space<vmem>>, vector<16x128xi32>
    tpu.vector_store %arg4[%c80, %c0_32], %90 {strides = array<i32>} : memref<128x128xi32, #tpu.memory_space<vmem>>, vector<16x128xi32>,
    %92 = arith.xori %45, %53 : vector<16x128xi32>
    %93 = arith.xori %92, %57 : vector<16x128xi32>
    %94 = vector.broadcast %0 : vector<16x1xi32> to vector<16x128xi32>
    %95 = arith.addi %93, %94 : vector<16x128xi32>
    %c96 = arith.constant 96 : index
    %c0_33 = arith.constant 0 : index
    %96 = vector.load %arg4[%c96, %c0_33] : memref<128x128xi32, #tpu.memory_space<vmem>>, vector<16x128xi32>
    tpu.vector_store %arg4[%c96, %c0_33], %95 {strides = array<i32>} : memref<128x128xi32, #tpu.memory_space<vmem>>, vector<16x128xi32>,
    %97 = arith.xori %45, %53 : vector<16x128xi32>
    %98 = arith.xori %97, %61 : vector<16x128xi32>
    %99 = vector.broadcast %0 : vector<16x1xi32> to vector<16x128xi32>
    %100 = arith.addi %98, %99 : vector<16x128xi32>
    %c112 = arith.constant 112 : index
    %c0_34 = arith.constant 0 : index
    %101 = vector.load %arg4[%c112, %c0_34] : memref<128x128xi32, #tpu.memory_space<vmem>>, vector<16x128xi32>
    tpu.vector_store %arg4[%c112, %c0_34], %100 {strides = array<i32>} : memref<128x128xi32, #tpu.memory_space<vmem>>, vector<16x128xi32>,
    return
  }
  func.func @transform_0(%arg0: i32) -> (i32, i32) {
    %c0_i32 = arith.constant 0 : i32
    %c0_i32_0 = arith.constant 0 : i32
    return %c0_i32, %arg0 : i32, i32
  }
  func.func @transform_1(%arg0: i32) -> (i32, i32) {
    %c0_i32 = arith.constant 0 : i32
    %c0_i32_0 = arith.constant 0 : i32
    %c0_i32_1 = arith.constant 0 : i32
    return %c0_i32, %c0_i32_0 : i32, i32
  }
  func.func @transform_2(%arg0: i32) -> (i32, i32) {
    %c0_i32 = arith.constant 0 : i32
    %c0_i32_0 = arith.constant 0 : i32
    %c0_i32_1 = arith.constant 0 : i32
    return %c0_i32, %c0_i32_0 : i32, i32
  }
  func.func @transform_3(%arg0: i32) -> (i32, i32) {
    %c0_i32 = arith.constant 0 : i32
    %c0_i32_0 = arith.constant 0 : i32
    return %c0_i32, %arg0 : i32, i32
  }
}

</mosaic_0001>

<llo_original>
// kernel: tpu_custom_call.1
$region0: #{tpu_custom_call.1}
  #allocation0 [shape = 'u32[]', space=smem, size = 0x4, offset = 0x4, fixed_abs, tag = 'smem constant byte address 0x4 - core index']
  #allocation1 [shape = 'u32[144,128]{1,0:T(1,128)}', space=vmem, size = 0x12000, scoped, tag = 'internal scratch']
  %s0 = inlined_call_operand.vmem [shape: f32[3,128], index: 0, kind: input, shape index: {}]
  %s1 = inlined_call_operand.vmem [shape: f32[48,1], index: 1, kind: input, shape index: {}]
  %s2 = inlined_call_operand.vmem [shape: s32[16,1], index: 2, kind: input, shape index: {}]
  %s3 = inlined_call_operand.hbm [shape: s32[128,128], index: 3, kind: output, shape index: {}]
  %s4 = sld [smem:[#allocation0]]
  $region22: #{tpu_custom_call.1} parent=0
    _
  %s6 = ssub.s32 1, %s4
  %s7 = scalar_select 0, %s6, %s4
  $region1: #{tpu_custom_call.1} parent=0
    #allocation2 [shape = 'u8[65536]{0}', space=vmem, size = 0x10000, scoped, tag = 'output window, operand 0, single buffered']
    #allocation3 [shape = 's32[1]{0}', space=sflag, size = 0x4, scoped, tag = 'scoped memory for tpu_custom_call.1']
    %8 = vsyncpa [#allocation3], 0
    // Predicated region
    $region2: #{tpu_custom_call.1} parent=1 // pred_check
      _
    $region3: #{tpu_custom_call.1} parent=1 // pred_check_branch
      %10 = sbr.rel (0) target = $region5
    $region4: #{tpu_custom_call.1} parent=1 // pred_region
      _
    $region5: #{tpu_custom_call.1} parent=1 // pred_fallthru
      _
    // Predicated region
    $region6: #{tpu_custom_call.1} parent=1 // pred_check
      _
    $region7: #{tpu_custom_call.1} parent=1 // pred_check_branch
      %12 = sbr.rel (0) target = $region9
    $region8: #{tpu_custom_call.1} parent=1 // pred_region
      _
    $region9: #{tpu_custom_call.1} parent=1 // pred_fallthru
      _
    // Predicated region
    $region10: #{tpu_custom_call.1} parent=1 // pred_check
      _
    $region11: #{tpu_custom_call.1} parent=1 // pred_check_branch
      %14 = sbr.rel (0) target = $region13
    $region12: #{tpu_custom_call.1} parent=1 // pred_region
      _
    $region13: #{tpu_custom_call.1} parent=1 // pred_fallthru
      _
    %v15 = vld [vmem:[%s2] sm:$0xff]
    %v16 = vld [vmem:[%s2 + $0x8] sm:$0xff]
    %v17 = vld [vmem:[%s0] sm:$0x1]
    %v18 = vld [vmem:[%s1] sm:$0xff]
    %v19 = vld [vmem:[%s1 + $0x8] sm:$0xff]
    %v20 = vmax.f32 %v17, -1.0
    %v21 = vmin.f32 %v20, 1.0
    %v22 = vsub.f32 %v21, -1.0
    %v23 = vlaneseq
    %v24 = vshrl.u32 %v23, 7
    %v25 = vsub.s32 0, %v24
    %v26 = vrot.slane %v22, %v25
    %28 = vset.pattern.permute.xlu0 0
    %29 = vperm.xlu0 %28, %v18
    %v30 = vpop.permute.xlu0 %29
    %33 = vset.pattern.permute.xlu0 0
    %34 = vperm.xlu0 %33, %v19
    %v35 = vpop.permute.xlu0 %34
    %v37 = vmul.f32 %v26, %v30
    %v38 = vmul.f32 %v26, %v35
    %v39 = vfloor.f32 %v37
    %v40 = vfloor.f32 %v38
    %v41 = vcvt.f32.s32.to.zero.pseudo %v39
    %v42 = vcvt.f32.s32.to.zero.pseudo %v40
    %v43 = vld [vmem:[%s0 + $0x1] sm:$0x1]
    %v44 = vld [vmem:[%s1 + $0x10] sm:$0xff]
    %v45 = vld [vmem:[%s1 + $0x18] sm:$0xff]
    %v46 = vmax.f32 %v43, -1.0
    %v47 = vmin.f32 %v46, 1.0
    %v48 = vsub.f32 %v47, -1.0
    %v49 = vlaneseq
    %v50 = vshrl.u32 %v49, 7
    %v51 = vsub.s32 0, %v50
    %v52 = vrot.slane %v48, %v51
    %54 = vset.pattern.permute.xlu0 0
    %55 = vperm.xlu0 %54, %v44
    %v56 = vpop.permute.xlu0 %55
    %59 = vset.pattern.permute.xlu0 0
    %60 = vperm.xlu0 %59, %v45
    %v61 = vpop.permute.xlu0 %60
    %v63 = vmul.f32 %v52, %v56
    %v64 = vmul.f32 %v52, %v61
    %v65 = vfloor.f32 %v63
    %v66 = vfloor.f32 %v64
    %v67 = vcvt.f32.s32.to.zero.pseudo %v65
    %v68 = vcvt.f32.s32.to.zero.pseudo %v66
    %v69 = vld [vmem:[%s0 + $0x2] sm:$0x1]
    %v70 = vld [vmem:[%s1 + $0x20] sm:$0xff]
    %v71 = vld [vmem:[%s1 + $0x28] sm:$0xff]
    %v72 = vmax.f32 %v69, -1.0
    %v73 = vmin.f32 %v72, 1.0
    %v74 = vsub.f32 %v73, -1.0
    %v75 = vlaneseq
    %v76 = vshrl.u32 %v75, 7
    %v77 = vsub.s32 0, %v76
    %v78 = vrot.slane %v74, %v77
    %80 = vset.pattern.permute.xlu0 0
    %81 = vperm.xlu0 %80, %v70
    %v82 = vpop.permute.xlu0 %81
    %85 = vset.pattern.permute.xlu0 0
    %86 = vperm.xlu0 %85, %v71
    %v87 = vpop.permute.xlu0 %86
    %v89 = vmul.f32 %v78, %v82
    %v90 = vmul.f32 %v78, %v87
    %v91 = vfloor.f32 %v89
    %v92 = vfloor.f32 %v90
    %v93 = vcvt.f32.s32.to.zero.pseudo %v91
    %v94 = vcvt.f32.s32.to.zero.pseudo %v92
    %v95 = vand.u32 %v41, 16383
    %v96 = vand.u32 %v42, 16383
    %v97 = vadd.s32 %v41, 1
    %v98 = vadd.s32 %v42, 1
    %v99 = vand.u32 %v97, 16383
    %v100 = vand.u32 %v98, 16383
    %v101 = vmul.u32 %v67, 2654435761
    %v102 = vmul.u32 %v68, 2654435761
    %v103 = vand.u32 %v101, 16383
    %v104 = vand.u32 %v102, 16383
    %v105 = vadd.s32 %v101, 2654435761
    %v106 = vadd.s32 %v102, 2654435761
    %v107 = vand.u32 %v105, 16383
    %v108 = vand.u32 %v106, 16383
    %v109 = vmul.u32 %v93, 805459861
    %v110 = vmul.u32 %v94, 805459861
    %v111 = vand.u32 %v109, 16383
    %v112 = vand.u32 %v110, 16383
    %v113 = vadd.s32 %v109, 805459861
    %v114 = vadd.s32 %v110, 805459861
    %v115 = vand.u32 %v113, 16383
    %v116 = vand.u32 %v114, 16383
    %v117 = vxor.u32 %v95, %v103
    %v118 = vxor.u32 %v96, %v104
    %v119 = vxor.u32 %v117, %v111
    %v120 = vxor.u32 %v118, %v112
    %121 = vset.pattern.permute.xlu0 0
    %122 = vperm.xlu0 %121, %v15
    %v123 = vpop.permute.xlu0 %122
    %124 = vset.pattern.permute.xlu0 0
    %125 = vperm.xlu0 %124, %v16
    %v126 = vpop.permute.xlu0 %125
    %v127 = vadd.s32 %v119, %v123
    %v128 = vadd.s32 %v120, %v126
    %129 = vst [vmem:[#allocation2] sm:$0xff] %v127
    %130 = vst [vmem:[#allocation2 + $0x8] sm:$0xff] %v128
    %v131 = vxor.u32 %v117, %v115
    %v132 = vxor.u32 %v118, %v116
    %v133 = vadd.s32 %v131, %v123
    %v134 = vadd.s32 %v132, %v126
    %135 = vst [vmem:[#allocation2 + $0x10] sm:$0xff] %v133
    %136 = vst [vmem:[#allocation2 + $0x18] sm:$0xff] %v134
    %v137 = vxor.u32 %v95, %v107
    %v138 = vxor.u32 %v96, %v108
    %v139 = vxor.u32 %v137, %v111
    %v140 = vxor.u32 %v138, %v112
    %v141 = vadd.s32 %v139, %v123
    %v142 = vadd.s32 %v140, %v126
    %143 = vst [vmem:[#allocation2 + $0x20] sm:$0xff] %v141
    %144 = vst [vmem:[#allocation2 + $0x28] sm:$0xff] %v142
    %v145 = vxor.u32 %v137, %v115
    %v146 = vxor.u32 %v138, %v116
    %v147 = vadd.s32 %v145, %v123
    %v148 = vadd.s32 %v146, %v126
    %149 = vst [vmem:[#allocation2 + $0x30] sm:$0xff] %v147
    %150 = vst [vmem:[#allocation2 + $0x38] sm:$0xff] %v148
    %v151 = vxor.u32 %v99, %v103
    %v152 = vxor.u32 %v100, %v104
    %v153 = vxor.u32 %v151, %v111
    %v154 = vxor.u32 %v152, %v112
    %v155 = vadd.s32 %v153, %v123
    %v156 = vadd.s32 %v154, %v126
    %157 = vst [vmem:[#allocation2 + $0x40] sm:$0xff] %v155
    %158 = vst [vmem:[#allocation2 + $0x48] sm:$0xff] %v156
    %v159 = vxor.u32 %v151, %v115
    %v160 = vxor.u32 %v152, %v116
    %v161 = vadd.s32 %v159, %v123
    %v162 = vadd.s32 %v160, %v126
    %163 = vst [vmem:[#allocation2 + $0x50] sm:$0xff] %v161
    %164 = vst [vmem:[#allocation2 + $0x58] sm:$0xff] %v162
    %v165 = vxor.u32 %v99, %v107
    %v166 = vxor.u32 %v100, %v108
    %v167 = vxor.u32 %v165, %v111
    %v168 = vxor.u32 %v166, %v112
    %v169 = vadd.s32 %v167, %v123
    %v170 = vadd.s32 %v168, %v126
    %171 = vst [vmem:[#allocation2 + $0x60] sm:$0xff] %v169
    %172 = vst [vmem:[#allocation2 + $0x68] sm:$0xff] %v170
    %v173 = vxor.u32 %v165, %v115
    %v174 = vxor.u32 %v166, %v116
    %v175 = vadd.s32 %v173, %v123
    %v176 = vadd.s32 %v174, %v126
    %177 = vst [vmem:[#allocation2 + $0x70] sm:$0xff] %v175
    %178 = vst [vmem:[#allocation2 + $0x78] sm:$0xff] %v176
    // Predicated region
    $region14: #{tpu_custom_call.1} parent=1 // pred_check
      _
    $region15: #{tpu_custom_call.1} parent=1 // pred_check_branch
      %180 = sbr.rel (0) target = $region17
    $region16: #{tpu_custom_call.1} parent=1 // pred_region
      %s182 = ssub.s32 2048, 2048
      %183 = vsyncadd [#allocation3], %s182
      %s184 = sshll.u32 [#allocation2], 4
      %s185 = int_to_ptr.vmem [resolvable:$true] %s184
      %190 = dma.vmem_to_hbm [thread:$0]  %s185, 2048, %s3, [#allocation3], 128, 128, 8
    $region17: #{tpu_custom_call.1} parent=1 // pred_fallthru
      _
    // Predicated region
    $region18: #{tpu_custom_call.1} parent=1 // pred_check
      _
    $region19: #{tpu_custom_call.1} parent=1 // pred_check_branch
      %192 = sbr.rel (0) target = $region21
    $region20: #{tpu_custom_call.1} parent=1 // pred_region
      %193 = dma.done [#allocation3], 2048
    $region21: #{tpu_custom_call.1} parent=1 // pred_fallthru
      _
    %194 = vsyncpa [#allocation3], 1

</llo_original>
